<compile_context>
chip_gen: v7x
topology: tpu7x:2x2x1
jax: 0.10.0
libtpu: 0.0.40
codegen_flags: <defaults>
</compile_context>

<pallas_src>
import math

import jax
import jax.numpy as jnp
from jax.experimental import pallas as pl
from jax.experimental.pallas import tpu as pltpu


# ----------------------------------------------------------------------------- helpers
def _round_up(v, mult):
    return ((v + mult - 1) // mult) * mult


def _vmem_capacity_bytes():
    """Physical VMEM per core; conservative fallback (v7x = 64 MiB)."""
    try:
        info = pltpu.get_tpu_info()
        cap = getattr(info, "vmem_capacity_bytes", None)
        if cap:
            return int(cap)
    except Exception:
        pass
    return 64 << 20


# ----------------------------------------------------------------------------- kernels
def _fused_resident_kernel(x_ref, w1_ref, b1_ref, w2_ref, b2_ref, o_ref):
    """(x @ W1 + b1) -> LeakyReLU(0.2) -> (@ W2 + b2) -> LeakyReLU(0.2).

    Both weights fully VMEM-resident; x arrives f32 and is cast on the VPU.
    """
    x = x_ref[...].astype(w1_ref.dtype)                       # f32 -> bf16 in-kernel
    h = jnp.dot(x, w1_ref[...], preferred_element_type=jnp.float32) + b1_ref[...]
    h = jnp.maximum(h, 0.2 * h)                               # LeakyReLU(0.2)
    y = jnp.dot(h.astype(w2_ref.dtype), w2_ref[...],
                preferred_element_type=jnp.float32) + b2_ref[...]
    y = jnp.maximum(y, 0.2 * y)                               # LeakyReLU(0.2)
    o_ref[...] = y.astype(o_ref.dtype)


def _fused_ntile_kernel(x_ref, w1_ref, b1_ref, w2_ref, b2_ref, o_ref, h_ref):
    """Same fusion, but W2 is streamed in column tiles (grid axis j).

    The hidden activations are computed once per row tile (j == 0) into a VMEM
    scratch and reused for the remaining W2 column tiles.
    """
    @pl.when(pl.program_id(1) == 0)
    def _():
        x = x_ref[...].astype(w1_ref.dtype)
        h = jnp.dot(x, w1_ref[...], preferred_element_type=jnp.float32) + b1_ref[...]
        h = jnp.maximum(h, 0.2 * h)
        h_ref[...] = h.astype(h_ref.dtype)

    y = jnp.dot(h_ref[...], w2_ref[...],
                preferred_element_type=jnp.float32) + b2_ref[...]
    y = jnp.maximum(y, 0.2 * y)
    o_ref[...] = y.astype(o_ref.dtype)


# ----------------------------------------------------------------------------- wrapper
def prepare_linear_block_params(w1, b1, w2, b2, *, lane_align=256,
                                compute_dtype=jnp.bfloat16):
    """One-time parameter prep: pad the feature dim to `lane_align`, cast to bf16.

    Padding is exact: padded hidden units stay 0 through the LeakyReLU and the
    padded W2 rows/cols are 0, so valid outputs are unchanged.
    w1: (in_dim, out_dim)  (pre-transposed vs. torch's (out, in)), b1: (out_dim,)
    w2: (out_dim, out_dim), b2: (out_dim,)
    """
    in_dim, out_dim = w1.shape
    assert w2.shape == (out_dim, out_dim)
    assert b1.shape == (out_dim,) and b2.shape == (out_dim,)

    out_dim_p = _round_up(out_dim, lane_align)
    pad_n = out_dim_p - out_dim
    if pad_n:
        w1 = jnp.pad(w1, ((0, 0), (0, pad_n)))
        b1 = jnp.pad(b1, ((0, pad_n),))
        w2 = jnp.pad(w2, ((0, pad_n), (0, pad_n)))
        b2 = jnp.pad(b2, ((0, pad_n), (0, pad_n))[:1] if False else ((0, pad_n),))
    return dict(
        w1=w1.astype(compute_dtype),
        b1=b1.reshape(1, out_dim_p).astype(jnp.float32),
        w2=w2.astype(compute_dtype),
        b2=b2.reshape(1, out_dim_p).astype(jnp.float32),
        in_dim=in_dim, out_dim=out_dim, out_dim_p=out_dim_p,
    )


def linear_block_apply(x, params, *, tile_m=512, out_dtype=jnp.float32):
    """x: (..., in_dim) -> (..., out_dim) using prepared (padded, bf16) params."""
    w1, b1 = params["w1"], params["b1"]
    w2, b2 = params["w2"], params["b2"]
    in_dim = params["in_dim"]
    out_dim = params["out_dim"]
    out_dim_p = params["out_dim_p"]
    assert x.shape[-1] == in_dim

    lead_shape = x.shape[:-1]
    m = int(math.prod(lead_shape)) if lead_shape else 1
    x2d = x.reshape(m, in_dim)            # stays f32: cast happens inside the kernel

    # --- Row-tile selection (multiples of 16 -> dense bf16 sublane packing).
    if m <= tile_m:
        if m >= 256:
            tile_m_eff = _round_up(pl.cdiv(m, 2), 16)   # keep both v7x cores busy
        else:
            tile_m_eff = m            # single block == full array dim (always legal)
    else:
        tile_m_eff = _round_up(tile_m, 16)

    cdt = jnp.dtype(w1.dtype).itemsize          # compute dtype bytes (bf16 = 2)
    xdt = jnp.dtype(x2d.dtype).itemsize
    odt = jnp.dtype(out_dtype).itemsize
    cap = _vmem_capacity_bytes()
    budget = cap - (8 << 20)                    # generation-aware cap w/ headroom

    def resident_est(tm):
        w_bytes = (in_dim * out_dim_p + out_dim_p * out_dim_p) * cdt   # single-buffered
        b_bytes = 2 * out_dim_p * 4                                    # single-buffered
        io_bytes = 2 * tm * (in_dim * xdt + out_dim_p * odt)           # double-buffered
        h_bytes = tm * out_dim_p * 4                                   # f32 intermediate
        return w_bytes + b_bytes + io_bytes + h_bytes + (2 << 20)

    # Prefer keeping both weights resident; shrink the row tile if that suffices.
    while resident_est(tile_m_eff) > budget and tile_m_eff > 128 and tile_m_eff < m:
        tile_m_eff = max(128, _round_up(tile_m_eff // 2, 16))
    grid_m = pl.cdiv(m, tile_m_eff)
    use_resident = resident_est(tile_m_eff) <= budget

    def _vmem_limit(est):
        # v5e default scoped VMEM is only 16 MiB -> raise the limit whenever
        # the estimate exceeds that; never request more than capacity-headroom.
        return None if est <= (16 << 20) else int(min(est, budget))

    if use_resident:
        est = resident_est(tile_m_eff)
        vmem_limit = _vmem_limit(est)

        def build(single_buffer):
            def res_spec(shape):
                if single_buffer:
                    return pl.BlockSpec(shape, lambda i: (0, 0),
                                        pipeline_mode=pl.Buffered(1))
                return pl.BlockSpec(shape, lambda i: (0, 0))

            return pl.pallas_call(
                _fused_resident_kernel,
                out_shape=jax.ShapeDtypeStruct((m, out_dim_p), out_dtype),
                grid_spec=pltpu.PrefetchScalarGridSpec(
                    num_scalar_prefetch=0,
                    grid=(grid_m,),
                    in_specs=[
                        pl.BlockSpec((tile_m_eff, in_dim), lambda i: (i, 0)),  # x rows
                        res_spec((in_dim, out_dim_p)),      # W1 resident, single-buffered
                        res_spec((1, out_dim_p)),           # b1
                        res_spec((out_dim_p, out_dim_p)),   # W2 resident, single-buffered
                        res_spec((1, out_dim_p)),           # b2
                    ],
                    out_specs=pl.BlockSpec((tile_m_eff, out_dim_p), lambda i: (i, 0)),
                ),
                compiler_params=pltpu.CompilerParams(
                    dimension_semantics=("parallel",),
                    vmem_limit_bytes=vmem_limit,
                ),
            )

        try:
            out = build(single_buffer=True)(x2d, w1, b1, w2, b2)
        except Exception:   # pl.Buffered(1)/pipeline_mode unsupported -> default buffering
            out = build(single_buffer=False)(x2d, w1, b1, w2, b2)

    else:
        # --- Stream W2 in column tiles (large out_dim, e.g. on v7x's 64 MiB VMEM).
        tile_n = 256 if out_dim_p % 256 == 0 else 128

        def ntile_est(tm, tn):
            w1_bytes = in_dim * out_dim_p * cdt + out_dim_p * 4        # resident, single
            w2_bytes = 2 * (out_dim_p * tn * cdt + tn * 4)             # streamed, double
            x_bytes = 2 * tm * in_dim * xdt
            h_bytes = tm * out_dim_p * cdt                             # bf16 scratch
            o_bytes = 2 * tm * tn * odt
            return w1_bytes + w2_bytes + x_bytes + h_bytes + o_bytes + (2 << 20)

        while ntile_est(tile_m_eff, tile_n) > budget and tile_m_eff > 128:
            tile_m_eff = max(128, _round_up(tile_m_eff // 2, 16))
        grid_m = pl.cdiv(m, tile_m_eff)
        grid_n = out_dim_p // tile_n
        est = ntile_est(tile_m_eff, tile_n)
        vmem_limit = _vmem_limit(est)

        def build(single_buffer):
            def res_spec(shape):
                if single_buffer:
                    return pl.BlockSpec(shape, lambda i, j: (0, 0),
                                        pipeline_mode=pl.Buffered(1))
                return pl.BlockSpec(shape, lambda i, j: (0, 0))

            return pl.pallas_call(
                _fused_ntile_kernel,
                out_shape=jax.ShapeDtypeStruct((m, out_dim_p), out_dtype),
                grid_spec=pltpu.PrefetchScalarGridSpec(
                    num_scalar_prefetch=0,
                    grid=(grid_m, grid_n),
                    in_specs=[
                        pl.BlockSpec((tile_m_eff, in_dim), lambda i, j: (i, 0)),  # x rows
                        res_spec((in_dim, out_dim_p)),                            # W1
                        res_spec((1, out_dim_p)),                                 # b1
                        pl.BlockSpec((out_dim_p, tile_n), lambda i, j: (0, j)),   # W2 stream
                        pl.BlockSpec((1, tile_n), lambda i, j: (0, j)),           # b2 stream
                    ],
                    out_specs=pl.BlockSpec((tile_m_eff, tile_n), lambda i, j: (i, j)),
                    scratch_shapes=[pltpu.VMEM((tile_m_eff, out_dim_p), w1.dtype)],
                ),
                compiler_params=pltpu.CompilerParams(
                    dimension_semantics=("parallel", "arbitrary"),
                    vmem_limit_bytes=vmem_limit,
                ),
            )

        try:
            out = build(single_buffer=True)(x2d, w1, b1, w2, b2)
        except Exception:
            out = build(single_buffer=False)(x2d, w1, b1, w2, b2)

    out = out[:, :out_dim]
    return out.reshape(*lead_shape, out_dim)


def linear_block(x, w1, b1, w2, b2, **kwargs):
    """Convenience wrapper for raw (unpadded, f32) params."""
    prep_kw = {k: kwargs.pop(k) for k in ("lane_align", "compute_dtype") if k in kwargs}
    params = prepare_linear_block_params(w1, b1, w2, b2, **prep_kw)
    return linear_block_apply(x, params, **kwargs)


# ----------------------------------------------------------------------------- init/ref
def init_linear_block_params(key, in_dim, out_dim):
    """Deterministic init mimicking kaiming_leaky_init (kaiming normal, a=0.2, fan_in)."""
    k1, k2 = jax.random.split(key, 2)
    gain = math.sqrt(2.0 / (1.0 + 0.2 ** 2))
    std1 = gain / math.sqrt(in_dim)
    std2 = gain / math.sqrt(out_dim)
    # Stored as (in_dim, out_dim): pre-transposed relative to torch's (out, in).
    w1 = jax.random.normal(k1, (in_dim, out_dim), jnp.float32) * std1
    w2 = jax.random.normal(k2, (out_dim, out_dim), jnp.float32) * std2
    b1 = jnp.zeros((out_dim,), jnp.float32)
    b2 = jnp.zeros((out_dim,), jnp.float32)
    return w1, b1, w2, b2


def _reference(x, w1, b1, w2, b2, compute_dtype=jnp.bfloat16):
    """Pure-JAX reference with the same bf16-operand / f32-accumulate numerics."""
    xc = x.astype(compute_dtype)
    h = jnp.dot(xc, w1.astype(compute_dtype),
                preferred_element_type=jnp.float32) + b1
    h = jnp.maximum(h, 0.2 * h)
    y = jnp.dot(h.astype(compute_dtype), w2.astype(compute_dtype),
                preferred_element_type=jnp.float32) + b2
    y = jnp.maximum(y, 0.2 * y)
    return y


if __name__ == "__main__":
    batch, seq, in_dim, out_dim = 2, 8, 32, 32

    key = jax.random.PRNGKey(0)
    kx, kp = jax.random.split(key)
    x = jax.random.normal(kx, (batch, seq, in_dim), jnp.float32)
    w1, b1, w2, b2 = init_linear_block_params(kp, in_dim, out_dim)

    # One-time parameter prep (pad + bf16 cast), then the fused kernel.
    params = prepare_linear_block_params(w1, b1, w2, b2)
    out = linear_block_apply(x, params)
    out = jax.block_until_ready(out)

    ref = _reference(x.reshape(-1, in_dim), w1, b1, w2, b2).reshape(batch, seq, out_dim)
    assert out.shape == (batch, seq, out_dim), out.shape
    assert jnp.allclose(out, ref, atol=1e-2, rtol=1e-2), "mismatch vs reference"

    print("KERNEL_OK")
</pallas_src>

<mosaic_0001>
module attributes {stable_mosaic.version = 11 : i64} {
  func.func @_fused_resident_kernel(%arg0: i32, %arg1: memref<16x32xf32, #tpu.memory_space<vmem>>, %arg2: memref<32x256xbf16, #tpu.memory_space<vmem>>, %arg3: memref<1x256xf32, #tpu.memory_space<vmem>>, %arg4: memref<256x256xbf16, #tpu.memory_space<vmem>>, %arg5: memref<1x256xf32, #tpu.memory_space<vmem>>, %arg6: memref<16x256xf32, #tpu.memory_space<vmem>>) attributes {dimension_semantics = [#tpu.dimension_semantics<parallel>], iteration_bounds = array<i64: 1>, scalar_prefetch = 0 : i64, scratch_operands = 0 : i64, tpu.core_type = #tpu.core_type<tc>, window_params = [{transform_indices = @transform_0, window_bounds = array<i64: 16, 32>}, {pipeline_mode = #tpu.pipeline_mode<synchronous>, transform_indices = @transform_1, window_bounds = array<i64: 32, 256>}, {pipeline_mode = #tpu.pipeline_mode<synchronous>, transform_indices = @transform_2, window_bounds = array<i64: 1, 256>}, {pipeline_mode = #tpu.pipeline_mode<synchronous>, transform_indices = @transform_3, window_bounds = array<i64: 256, 256>}, {pipeline_mode = #tpu.pipeline_mode<synchronous>, transform_indices = @transform_4, window_bounds = array<i64: 1, 256>}, {transform_indices = @transform_5, window_bounds = array<i64: 16, 256>}]} {
    %c0 = arith.constant 0 : index
    %c0_0 = arith.constant 0 : index
    %0 = vector.load %arg1[%c0, %c0_0] : memref<16x32xf32, #tpu.memory_space<vmem>>, vector<16x32xf32>
    %1 = arith.truncf %0 : vector<16x32xf32> to vector<16x32xbf16>
    %c0_1 = arith.constant 0 : index
    %c0_2 = arith.constant 0 : index
    %2 = vector.load %arg2[%c0_1, %c0_2] : memref<32x256xbf16, #tpu.memory_space<vmem>>, vector<32x256xbf16>
    %cst = arith.constant dense<0.000000e+00> : vector<16x256xf32>
    %3 = tpu.matmul %1, %2, %cst {dimension_numbers = #tpu.dot_dimension_numbers<[1], [0], [0], [1], [0, 0, 1, 1], [], []>} : vector<16x32xbf16>, vector<32x256xbf16>, vector<16x256xf32> -> vector<16x256xf32>
    %c0_3 = arith.constant 0 : index
    %c0_4 = arith.constant 0 : index
    %4 = vector.load %arg3[%c0_3, %c0_4] : memref<1x256xf32, #tpu.memory_space<vmem>>, vector<1x256xf32>
    %5 = vector.broadcast %4 : vector<1x256xf32> to vector<16x256xf32>
    %6 = arith.addf %3, %5 : vector<16x256xf32>
    %cst_5 = arith.constant 2.000000e-01 : f32
    %7 = vector.broadcast %cst_5 : f32 to vector<16x256xf32>
    %8 = arith.mulf %7, %6 : vector<16x256xf32>
    %9 = arith.maximumf %6, %8 : vector<16x256xf32>
    %10 = arith.truncf %9 : vector<16x256xf32> to vector<16x256xbf16>
    %c0_6 = arith.constant 0 : index
    %c0_7 = arith.constant 0 : index
    %11 = vector.load %arg4[%c0_6, %c0_7] : memref<256x256xbf16, #tpu.memory_space<vmem>>, vector<256x256xbf16>
    %cst_8 = arith.constant dense<0.000000e+00> : vector<16x256xf32>
    %12 = tpu.matmul %10, %11, %cst_8 {dimension_numbers = #tpu.dot_dimension_numbers<[1], [0], [0], [1], [0, 0, 1, 1], [], []>} : vector<16x256xbf16>, vector<256x256xbf16>, vector<16x256xf32> -> vector<16x256xf32>
    %c0_9 = arith.constant 0 : index
    %c0_10 = arith.constant 0 : index
    %13 = vector.load %arg5[%c0_9, %c0_10] : memref<1x256xf32, #tpu.memory_space<vmem>>, vector<1x256xf32>
    %14 = vector.broadcast %13 : vector<1x256xf32> to vector<16x256xf32>
    %15 = arith.addf %12, %14 : vector<16x256xf32>
    %cst_11 = arith.constant 2.000000e-01 : f32
    %16 = vector.broadcast %cst_11 : f32 to vector<16x256xf32>
    %17 = arith.mulf %16, %15 : vector<16x256xf32>
    %18 = arith.maximumf %15, %17 : vector<16x256xf32>
    %c0_12 = arith.constant 0 : index
    %c0_13 = arith.constant 0 : index
    %19 = vector.load %arg6[%c0_12, %c0_13] : memref<16x256xf32, #tpu.memory_space<vmem>>, vector<16x256xf32>
    tpu.vector_store %arg6[%c0_12, %c0_13], %18 {strides = array<i32>} : memref<16x256xf32, #tpu.memory_space<vmem>>, vector<16x256xf32>,
    return
  }
  func.func @transform_0(%arg0: i32) -> (i32, i32) {
    %c0_i32 = arith.constant 0 : i32
    %c0_i32_0 = arith.constant 0 : i32
    return %arg0, %c0_i32 : i32, i32
  }
  func.func @transform_1(%arg0: i32) -> (i32, i32) {
    %c0_i32 = arith.constant 0 : i32
    %c0_i32_0 = arith.constant 0 : i32
    %c0_i32_1 = arith.constant 0 : i32
    return %c0_i32, %c0_i32_0 : i32, i32
  }
  func.func @transform_2(%arg0: i32) -> (i32, i32) {
    %c0_i32 = arith.constant 0 : i32
    %c0_i32_0 = arith.constant 0 : i32
    %c0_i32_1 = arith.constant 0 : i32
    return %c0_i32, %c0_i32_0 : i32, i32
  }
  func.func @transform_3(%arg0: i32) -> (i32, i32) {
    %c0_i32 = arith.constant 0 : i32
    %c0_i32_0 = arith.constant 0 : i32
    %c0_i32_1 = arith.constant 0 : i32
    return %c0_i32, %c0_i32_0 : i32, i32
  }
  func.func @transform_4(%arg0: i32) -> (i32, i32) {
    %c0_i32 = arith.constant 0 : i32
    %c0_i32_0 = arith.constant 0 : i32
    %c0_i32_1 = arith.constant 0 : i32
    return %c0_i32, %c0_i32_0 : i32, i32
  }
  func.func @transform_5(%arg0: i32) -> (i32, i32) {
    %c0_i32 = arith.constant 0 : i32
    %c0_i32_0 = arith.constant 0 : i32
    return %arg0, %c0_i32 : i32, i32
  }
}

module attributes {stable_mosaic.version = 11 : i64} {
  func.func @_fused_resident_kernel(%arg0: i32, %arg1: memref<16x32xf32, #tpu.memory_space<vmem>>, %arg2: memref<32x256xbf16, #tpu.memory_space<vmem>>, %arg3: memref<1x256xf32, #tpu.memory_space<vmem>>, %arg4: memref<256x256xbf16, #tpu.memory_space<vmem>>, %arg5: memref<1x256xf32, #tpu.memory_space<vmem>>, %arg6: memref<16x256xf32, #tpu.memory_space<vmem>>) attributes {dimension_semantics = [#tpu.dimension_semantics<parallel>], iteration_bounds = array<i64: 1>, scalar_prefetch = 0 : i64, scratch_operands = 0 : i64, tpu.core_type = #tpu.core_type<tc>, window_params = [{transform_indices = @transform_0, window_bounds = array<i64: 16, 32>}, {pipeline_mode = #tpu.pipeline_mode<synchronous>, transform_indices = @transform_1, window_bounds = array<i64: 32, 256>}, {pipeline_mode = #tpu.pipeline_mode<synchronous>, transform_indices = @transform_2, window_bounds = array<i64: 1, 256>}, {pipeline_mode = #tpu.pipeline_mode<synchronous>, transform_indices = @transform_3, window_bounds = array<i64: 256, 256>}, {pipeline_mode = #tpu.pipeline_mode<synchronous>, transform_indices = @transform_4, window_bounds = array<i64: 1, 256>}, {transform_indices = @transform_5, window_bounds = array<i64: 16, 256>}]} {
    %c0 = arith.constant 0 : index
    %c0_0 = arith.constant 0 : index
    %0 = vector.load %arg1[%c0, %c0_0] : memref<16x32xf32, #tpu.memory_space<vmem>>, vector<16x32xf32>
    %1 = arith.truncf %0 : vector<16x32xf32> to vector<16x32xbf16>
    %c0_1 = arith.constant 0 : index
    %c0_2 = arith.constant 0 : index
    %2 = vector.load %arg2[%c0_1, %c0_2] : memref<32x256xbf16, #tpu.memory_space<vmem>>, vector<32x256xbf16>
    %cst = arith.constant dense<0.000000e+00> : vector<16x256xf32>
    %3 = tpu.matmul %1, %2, %cst {dimension_numbers = #tpu.dot_dimension_numbers<[1], [0], [0], [1], [0, 0, 1, 1], [], []>} : vector<16x32xbf16>, vector<32x256xbf16>, vector<16x256xf32> -> vector<16x256xf32>
    %c0_3 = arith.constant 0 : index
    %c0_4 = arith.constant 0 : index
    %4 = vector.load %arg3[%c0_3, %c0_4] : memref<1x256xf32, #tpu.memory_space<vmem>>, vector<1x256xf32>
    %5 = vector.broadcast %4 : vector<1x256xf32> to vector<16x256xf32>
    %6 = arith.addf %3, %5 : vector<16x256xf32>
    %cst_5 = arith.constant 2.000000e-01 : f32
    %7 = vector.broadcast %cst_5 : f32 to vector<16x256xf32>
    %8 = arith.mulf %7, %6 : vector<16x256xf32>
    %9 = arith.maximumf %6, %8 : vector<16x256xf32>
    %10 = arith.truncf %9 : vector<16x256xf32> to vector<16x256xbf16>
    %c0_6 = arith.constant 0 : index
    %c0_7 = arith.constant 0 : index
    %11 = vector.load %arg4[%c0_6, %c0_7] : memref<256x256xbf16, #tpu.memory_space<vmem>>, vector<256x256xbf16>
    %cst_8 = arith.constant dense<0.000000e+00> : vector<16x256xf32>
    %12 = tpu.matmul %10, %11, %cst_8 {dimension_numbers = #tpu.dot_dimension_numbers<[1], [0], [0], [1], [0, 0, 1, 1], [], []>} : vector<16x256xbf16>, vector<256x256xbf16>, vector<16x256xf32> -> vector<16x256xf32>
    %c0_9 = arith.constant 0 : index
    %c0_10 = arith.constant 0 : index
    %13 = vector.load %arg5[%c0_9, %c0_10] : memref<1x256xf32, #tpu.memory_space<vmem>>, vector<1x256xf32>
    %14 = vector.broadcast %13 : vector<1x256xf32> to vector<16x256xf32>
    %15 = arith.addf %12, %14 : vector<16x256xf32>
    %cst_11 = arith.constant 2.000000e-01 : f32
    %16 = vector.broadcast %cst_11 : f32 to vector<16x256xf32>
    %17 = arith.mulf %16, %15 : vector<16x256xf32>
    %18 = arith.maximumf %15, %17 : vector<16x256xf32>
    %c0_12 = arith.constant 0 : index
    %c0_13 = arith.constant 0 : index
    %19 = vector.load %arg6[%c0_12, %c0_13] : memref<16x256xf32, #tpu.memory_space<vmem>>, vector<16x256xf32>
    tpu.vector_store %arg6[%c0_12, %c0_13], %18 {strides = array<i32>} : memref<16x256xf32, #tpu.memory_space<vmem>>, vector<16x256xf32>,
    return
  }
  func.func @transform_0(%arg0: i32) -> (i32, i32) {
    %c0_i32 = arith.constant 0 : i32
    %c0_i32_0 = arith.constant 0 : i32
    return %arg0, %c0_i32 : i32, i32
  }
  func.func @transform_1(%arg0: i32) -> (i32, i32) {
    %c0_i32 = arith.constant 0 : i32
    %c0_i32_0 = arith.constant 0 : i32
    %c0_i32_1 = arith.constant 0 : i32
    return %c0_i32, %c0_i32_0 : i32, i32
  }
  func.func @transform_2(%arg0: i32) -> (i32, i32) {
    %c0_i32 = arith.constant 0 : i32
    %c0_i32_0 = arith.constant 0 : i32
    %c0_i32_1 = arith.constant 0 : i32
    return %c0_i32, %c0_i32_0 : i32, i32
  }
  func.func @transform_3(%arg0: i32) -> (i32, i32) {
    %c0_i32 = arith.constant 0 : i32
    %c0_i32_0 = arith.constant 0 : i32
    %c0_i32_1 = arith.constant 0 : i32
    return %c0_i32, %c0_i32_0 : i32, i32
  }
  func.func @transform_4(%arg0: i32) -> (i32, i32) {
    %c0_i32 = arith.constant 0 : i32
    %c0_i32_0 = arith.constant 0 : i32
    %c0_i32_1 = arith.constant 0 : i32
    return %c0_i32, %c0_i32_0 : i32, i32
  }
  func.func @transform_5(%arg0: i32) -> (i32, i32) {
    %c0_i32 = arith.constant 0 : i32
    %c0_i32_0 = arith.constant 0 : i32
    return %arg0, %c0_i32 : i32, i32
  }
}

</mosaic_0001>

<llo_original>
// kernel: tpu_custom_call.1
$region0: #{tpu_custom_call.1}
  #allocation0 [shape = 'u32[]', space=smem, size = 0x4, offset = 0x4, fixed_abs, tag = 'smem constant byte address 0x4 - core index']
  #allocation1 [shape = 'u32[144,128]{1,0:T(1,128)}', space=vmem, size = 0x12000, scoped, tag = 'internal scratch']
  %s0 = inlined_call_operand.hbm [shape: f32[16,32], index: 0, kind: input, shape index: {}]
  %s1 = inlined_call_operand.hbm [shape: bf16[32,256], index: 1, kind: input, shape index: {}]
  %s2 = inlined_call_operand.vmem [shape: f32[1,256], index: 2, kind: input, shape index: {}]
  %s3 = inlined_call_operand.hbm [shape: bf16[256,256], index: 3, kind: input, shape index: {}]
  %s4 = inlined_call_operand.vmem [shape: f32[1,256], index: 4, kind: input, shape index: {}]
  %s5 = inlined_call_operand.hbm [shape: f32[16,256], index: 5, kind: output, shape index: {}]
  %s6 = sld [smem:[#allocation0]]
  $region42: #{tpu_custom_call.1} parent=0
    _
  %s8 = ssub.s32 1, %s6
  %s9 = scalar_select 0, %s8, %s6
  $region1: #{tpu_custom_call.1} parent=0
    #allocation2 [shape = 'u8[8192]{0}', space=vmem, size = 0x2000, scoped, tag = 'input window, operand 0, single buffered']
    #allocation3 [shape = 's32[1]{0}', space=sflag, size = 0x4, scoped, tag = 'scoped memory for tpu_custom_call.1']
    #allocation4 [shape = 's32[1]{0}', space=sflag, size = 0x4, scoped, tag = 'scoped memory for tpu_custom_call.1']
    #allocation5 [shape = 'u8[16384]{0}', space=vmem, size = 0x4000, scoped, tag = 'input window, operand 1, single buffered']
    #allocation6 [shape = 's32[1]{0}', space=sflag, size = 0x4, scoped, tag = 'scoped memory for tpu_custom_call.1']
    #allocation7 [shape = 'u8[131072]{0}', space=vmem, size = 0x20000, scoped, tag = 'input window, operand 3, single buffered']
    #allocation8 [shape = 'u8[16384]{0}', space=vmem, size = 0x4000, scoped, tag = 'output window, operand 0, single buffered']
    %10 = vsyncpa [#allocation3], 0
    %11 = vsyncpa [#allocation6], 0
    %12 = vsyncpa [#allocation4], 0
    // Predicated region
    $region2: #{tpu_custom_call.1} parent=1 // pred_check
      _
    $region3: #{tpu_custom_call.1} parent=1 // pred_check_branch
      %14 = sbr.rel (0) target = $region5
    $region4: #{tpu_custom_call.1} parent=1 // pred_region
      %s16 = ssub.s32 256, 256
      %17 = vsyncadd [#allocation3], %s16
      %s18 = sshll.u32 [#allocation2], 4
      %s19 = int_to_ptr.vmem [resolvable:$true] %s18
      %24 = dma.hbm_to_vmem [thread:$0]  %s0, 256, %s19, [#allocation3], 128, 128, 8
    $region5: #{tpu_custom_call.1} parent=1 // pred_fallthru
      _
    // Predicated region
    $region6: #{tpu_custom_call.1} parent=1 // pred_check
      _
    $region7: #{tpu_custom_call.1} parent=1 // pred_check_branch
      %26 = sbr.rel (0) target = $region9
    $region8: #{tpu_custom_call.1} parent=1 // pred_region
      %s28 = ssub.s32 512, 512
      %29 = vsyncadd [#allocation6], %s28
      %s30 = sshll.u32 [#allocation5], 4
      %s31 = int_to_ptr.vmem [resolvable:$true] %s30
      %36 = dma.hbm_to_vmem [thread:$0]  %s1, 512, %s31, [#allocation6], 128, 128, 8
    $region9: #{tpu_custom_call.1} parent=1 // pred_fallthru
      _
    // Predicated region
    $region10: #{tpu_custom_call.1} parent=1 // pred_check
      _
    $region11: #{tpu_custom_call.1} parent=1 // pred_check_branch
      %38 = sbr.rel (0) target = $region13
    $region12: #{tpu_custom_call.1} parent=1 // pred_region
      _
    $region13: #{tpu_custom_call.1} parent=1 // pred_fallthru
      _
    // Predicated region
    $region14: #{tpu_custom_call.1} parent=1 // pred_check
      _
    $region15: #{tpu_custom_call.1} parent=1 // pred_check_branch
      %40 = sbr.rel (0) target = $region17
    $region16: #{tpu_custom_call.1} parent=1 // pred_region
      %s42 = ssub.s32 4096, 4096
      %43 = vsyncadd [#allocation6], %s42
      %s44 = sshll.u32 [#allocation7], 4
      %s45 = int_to_ptr.vmem [resolvable:$true] %s44
      %50 = dma.hbm_to_vmem [thread:$0]  %s3, 4096, %s45, [#allocation6], 128, 128, 8
    $region17: #{tpu_custom_call.1} parent=1 // pred_fallthru
      _
    // Predicated region
    $region18: #{tpu_custom_call.1} parent=1 // pred_check
      _
    $region19: #{tpu_custom_call.1} parent=1 // pred_check_branch
      %52 = sbr.rel (0) target = $region21
    $region20: #{tpu_custom_call.1} parent=1 // pred_region
      _
    $region21: #{tpu_custom_call.1} parent=1 // pred_fallthru
      _
    // Predicated region
    $region22: #{tpu_custom_call.1} parent=1 // pred_check
      _
    $region23: #{tpu_custom_call.1} parent=1 // pred_check_branch
      %54 = sbr.rel (0) target = $region25
    $region24: #{tpu_custom_call.1} parent=1 // pred_region
      %55 = dma.done [#allocation3], 256
    $region25: #{tpu_custom_call.1} parent=1 // pred_fallthru
      _
    // Predicated region
    $region26: #{tpu_custom_call.1} parent=1 // pred_check
      _
    $region27: #{tpu_custom_call.1} parent=1 // pred_check_branch
      %57 = sbr.rel (0) target = $region29
    $region28: #{tpu_custom_call.1} parent=1 // pred_region
      %58 = dma.done [#allocation6], 512
    $region29: #{tpu_custom_call.1} parent=1 // pred_fallthru
      _
    // Predicated region
    $region30: #{tpu_custom_call.1} parent=1 // pred_check
      _
    $region31: #{tpu_custom_call.1} parent=1 // pred_check_branch
      %60 = sbr.rel (0) target = $region33
    $region32: #{tpu_custom_call.1} parent=1 // pred_region
      %61 = dma.done [#allocation6], 4096
    $region33: #{tpu_custom_call.1} parent=1 // pred_fallthru
      _
    %v63 = vld [vmem:[#allocation2] sm:$0xff]
    %v64 = vld [vmem:[#allocation2 + $0x8] sm:$0xff]
    %v65 = vpack.c.bf16 %v64, %v63
    %v66 = vld [vmem:[#allocation5] sm:$0xff]
    %v67 = vld [vmem:[#allocation5 + $0x8] sm:$0xff]
    %v68 = vld [vmem:[#allocation5 + $0x10] sm:$0xff]
    %v69 = vld [vmem:[#allocation5 + $0x18] sm:$0xff]
    %v70 = vld [vmem:[%s2] sm:$0x3]
    %v72 = vlaneseq
    %v73 = vshrl.u32 %v72, 7
    %v74 = vsub.s32 0, %v73
    %v75 = vrot.slane %v70, %v74
    %v76 = vlaneseq
    %v77 = vshrl.u32 %v76, 7
    %v78 = vsub.s32 1, %v77
    %v79 = vrot.slane %v70, %v78
    %v86 = vunpack.c.l.b16 %v66
    %v87 = vunpack.c.h.b16 %v66
    %v88 = vunpack.c.l.b16 %v67
    %v89 = vunpack.c.h.b16 %v67
    %v90 = vunpack.c.l.b16 %v68
    %v91 = vunpack.c.h.b16 %v68
    %v92 = vunpack.c.l.b16 %v69
    %v93 = vunpack.c.h.b16 %v69
    %v94 = vpack.c.b16 %v88, %v86
    %v95 = vpack.c.b16 %v89, %v87
    %v96 = vpack.c.b16 %v92, %v90
    %v97 = vpack.c.b16 %v93, %v91
    %vm102 = vcmask 261120
    %v104 = vsel %vm102, %v65, 0
    %106 = vmatprep.subr.bf16.mxu0 %v95
    %107 = vmatpush1.bf16.msra.mxu0 %v94
    %108 = vmatprep.subr.bf16.mxu0 %v97
    %109 = vmatpush1.bf16.msra.mxu0 %v96
    %110 = vmatprep.subr.bf16.mxu0 0
    %111 = vmatpush1.bf16.msra.mxu0 0
    %112 = vmatprep.subr.bf16.mxu0 0
    %113 = vmatpush1.bf16.msra.mxu0 0
    %114 = vmatprep.subr.bf16.mxu0 0
    %115 = vmatpush1.bf16.msra.mxu0 0
    %116 = vmatprep.subr.bf16.mxu0 0
    %117 = vmatpush1.bf16.msra.mxu0 0
    %118 = vmatprep.subr.bf16.mxu0 0
    %119 = vmatpush1.bf16.msra.mxu0 0
    %120 = vmatprep.subr.bf16.mxu0 0
    %121 = vmatpush1.bf16.msra.mxu0 0
    %122 = vmatprep.subr.bf16.mxu0 0
    %123 = vmatpush1.bf16.msra.mxu0 0
    %124 = vmatprep.subr.bf16.mxu0 0
    %125 = vmatpush1.bf16.msra.mxu0 0
    %126 = vmatprep.subr.bf16.mxu0 0
    %127 = vmatpush1.bf16.msra.mxu0 0
    %128 = vmatprep.subr.bf16.mxu0 0
    %129 = vmatpush1.bf16.msra.mxu0 0
    %130 = vmatprep.subr.bf16.mxu0 0
    %131 = vmatpush1.bf16.msra.mxu0 0
    %132 = vmatprep.subr.bf16.mxu0 0
    %133 = vmatpush1.bf16.msra.mxu0 0
    %134 = vmatprep.subr.bf16.mxu0 0
    %135 = vmatpush1.bf16.msra.mxu0 0
    %136 = vmatprep.subr.bf16.mxu0 0
    %137 = vmatpush1.bf16.msra.mxu0 0
    %138 = vmatprep.mubr.bf16.mxu0 0
    %139 = vmatmul.mubr.bf16.gmra.mrb[0].mxu0 %v104
    %v140 = vpop.f32.mrb[0].mxu0
    %v141 = vadd.f32 %v75, %v140
    %v142 = vpop.f32.mrb[0].mxu0
    %v143 = vadd.f32 %v79, %v142
    %v144 = vpop.f32.mrb[0].mxu0
    %v145 = vadd.f32 %v75, %v144
    %v146 = vpop.f32.mrb[0].mxu0
    %v147 = vadd.f32 %v79, %v146
    %148 = vdwg.mxu0
    %v149 = vmul.f32 %v141, 0.2
    %v150 = vmul.f32 %v143, 0.2
    %v151 = vmul.f32 %v145, 0.2
    %v152 = vmul.f32 %v147, 0.2
    %v153 = vmax.f32 %v141, %v149
    %v154 = vmax.f32 %v143, %v150
    %v155 = vmax.f32 %v145, %v151
    %v156 = vmax.f32 %v147, %v152
    %v157 = vpack.c.bf16 %v155, %v153
    %v158 = vpack.c.bf16 %v156, %v154
    %v159 = vld [vmem:[#allocation7] sm:$0xff]
    %v160 = vld [vmem:[#allocation7 + $0x8] sm:$0xff]
    %v161 = vld [vmem:[#allocation7 + $0x10] sm:$0xff]
    %v162 = vld [vmem:[#allocation7 + $0x18] sm:$0xff]
    %v163 = vld [vmem:[#allocation7 + $0x20] sm:$0xff]
    %v164 = vld [vmem:[#allocation7 + $0x28] sm:$0xff]
    %v165 = vld [vmem:[#allocation7 + $0x30] sm:$0xff]
    %v166 = vld [vmem:[#allocation7 + $0x38] sm:$0xff]
    %v167 = vld [vmem:[#allocation7 + $0x40] sm:$0xff]
    %v168 = vld [vmem:[#allocation7 + $0x48] sm:$0xff]
    %v169 = vld [vmem:[#allocation7 + $0x50] sm:$0xff]
    %v170 = vld [vmem:[#allocation7 + $0x58] sm:$0xff]
    %v171 = vld [vmem:[#allocation7 + $0x60] sm:$0xff]
    %v172 = vld [vmem:[#allocation7 + $0x68] sm:$0xff]
    %v173 = vld [vmem:[#allocation7 + $0x70] sm:$0xff]
    %v174 = vld [vmem:[#allocation7 + $0x78] sm:$0xff]
    %v175 = vld [vmem:[#allocation7 + $0x80] sm:$0xff]
    %v176 = vld [vmem:[#allocation7 + $0x88] sm:$0xff]
    %v177 = vld [vmem:[#allocation7 + $0x90] sm:$0xff]
    %v178 = vld [vmem:[#allocation7 + $0x98] sm:$0xff]
    %v179 = vld [vmem:[#allocation7 + $0xa0] sm:$0xff]
    %v180 = vld [vmem:[#allocation7 + $0xa8] sm:$0xff]
    %v181 = vld [vmem:[#allocation7 + $0xb0] sm:$0xff]
    %v182 = vld [vmem:[#allocation7 + $0xb8] sm:$0xff]
    %v183 = vld [vmem:[#allocation7 + $0xc0] sm:$0xff]
    %v184 = vld [vmem:[#allocation7 + $0xc8] sm:$0xff]
    %v185 = vld [vmem:[#allocation7 + $0xd0] sm:$0xff]
    %v186 = vld [vmem:[#allocation7 + $0xd8] sm:$0xff]
    %v187 = vld [vmem:[#allocation7 + $0xe0] sm:$0xff]
    %v188 = vld [vmem:[#allocation7 + $0xe8] sm:$0xff]
    %v189 = vld [vmem:[#allocation7 + $0xf0] sm:$0xff]
    %v190 = vld [vmem:[#allocation7 + $0xf8] sm:$0xff]
    %v191 = vld [vmem:[%s4] sm:$0x3]
    %v193 = vlaneseq
    %v194 = vshrl.u32 %v193, 7
    %v195 = vsub.s32 0, %v194
    %v196 = vrot.slane %v191, %v195
    %v197 = vlaneseq
    %v198 = vshrl.u32 %v197, 7
    %v199 = vsub.s32 1, %v198
    %v200 = vrot.slane %v191, %v199
    %v235 = vunpack.c.l.b16 %v159
    %v236 = vunpack.c.h.b16 %v159
    %v237 = vunpack.c.l.b16 %v160
    %v238 = vunpack.c.h.b16 %v160
    %v239 = vunpack.c.l.b16 %v161
    %v240 = vunpack.c.h.b16 %v161
    %v241 = vunpack.c.l.b16 %v162
    %v242 = vunpack.c.h.b16 %v162
    %v243 = vunpack.c.l.b16 %v163
    %v244 = vunpack.c.h.b16 %v163
    %v245 = vunpack.c.l.b16 %v164
    %v246 = vunpack.c.h.b16 %v164
    %v247 = vunpack.c.l.b16 %v165
    %v248 = vunpack.c.h.b16 %v165
    %v249 = vunpack.c.l.b16 %v166
    %v250 = vunpack.c.h.b16 %v166
    %v251 = vunpack.c.l.b16 %v167
    %v252 = vunpack.c.h.b16 %v167
    %v253 = vunpack.c.l.b16 %v168
    %v254 = vunpack.c.h.b16 %v168
    %v255 = vunpack.c.l.b16 %v169
    %v256 = vunpack.c.h.b16 %v169
    %v257 = vunpack.c.l.b16 %v170
    %v258 = vunpack.c.h.b16 %v170
    %v259 = vunpack.c.l.b16 %v171
    %v260 = vunpack.c.h.b16 %v171
    %v261 = vunpack.c.l.b16 %v172
    %v262 = vunpack.c.h.b16 %v172
    %v263 = vunpack.c.l.b16 %v173
    %v264 = vunpack.c.h.b16 %v173
    %v265 = vunpack.c.l.b16 %v174
    %v266 = vunpack.c.h.b16 %v174
    %v267 = vunpack.c.l.b16 %v175
    %v268 = vunpack.c.h.b16 %v175
    %v269 = vunpack.c.l.b16 %v176
    %v270 = vunpack.c.h.b16 %v176
    %v271 = vunpack.c.l.b16 %v177
    %v272 = vunpack.c.h.b16 %v177
    %v273 = vunpack.c.l.b16 %v178
    %v274 = vunpack.c.h.b16 %v178
    %v275 = vunpack.c.l.b16 %v179
    %v276 = vunpack.c.h.b16 %v179
    %v277 = vunpack.c.l.b16 %v180
    %v278 = vunpack.c.h.b16 %v180
    %v279 = vunpack.c.l.b16 %v181
    %v280 = vunpack.c.h.b16 %v181
    %v281 = vunpack.c.l.b16 %v182
    %v282 = vunpack.c.h.b16 %v182
    %v283 = vunpack.c.l.b16 %v183
    %v284 = vunpack.c.h.b16 %v183
    %v285 = vunpack.c.l.b16 %v184
    %v286 = vunpack.c.h.b16 %v184
    %v287 = vunpack.c.l.b16 %v185
    %v288 = vunpack.c.h.b16 %v185
    %v289 = vunpack.c.l.b16 %v186
    %v290 = vunpack.c.h.b16 %v186
    %v291 = vunpack.c.l.b16 %v187
    %v292 = vunpack.c.h.b16 %v187
    %v293 = vunpack.c.l.b16 %v188
    %v294 = vunpack.c.h.b16 %v188
    %v295 = vunpack.c.l.b16 %v189
    %v296 = vunpack.c.h.b16 %v189
    %v297 = vunpack.c.l.b16 %v190
    %v298 = vunpack.c.h.b16 %v190
    %v299 = vpack.c.b16 %v237, %v235
    %v300 = vpack.c.b16 %v238, %v236
    %v301 = vpack.c.b16 %v241, %v239
    %v302 = vpack.c.b16 %v242, %v240
    %v303 = vpack.c.b16 %v245, %v243
    %v304 = vpack.c.b16 %v246, %v244
    %v305 = vpack.c.b16 %v249, %v247
    %v306 = vpack.c.b16 %v250, %v248
    %v307 = vpack.c.b16 %v253, %v251
    %v308 = vpack.c.b16 %v254, %v252
    %v309 = vpack.c.b16 %v257, %v255
    %v310 = vpack.c.b16 %v258, %v256
    %v311 = vpack.c.b16 %v261, %v259
    %v312 = vpack.c.b16 %v262, %v260
    %v313 = vpack.c.b16 %v265, %v263
    %v314 = vpack.c.b16 %v266, %v264
    %v315 = vpack.c.b16 %v269, %v267
    %v316 = vpack.c.b16 %v270, %v268
    %v317 = vpack.c.b16 %v273, %v271
    %v318 = vpack.c.b16 %v274, %v272
    %v319 = vpack.c.b16 %v277, %v275
    %v320 = vpack.c.b16 %v278, %v276
    %v321 = vpack.c.b16 %v281, %v279
    %v322 = vpack.c.b16 %v282, %v280
    %v323 = vpack.c.b16 %v285, %v283
    %v324 = vpack.c.b16 %v286, %v284
    %v325 = vpack.c.b16 %v289, %v287
    %v326 = vpack.c.b16 %v290, %v288
    %v327 = vpack.c.b16 %v293, %v291
    %v328 = vpack.c.b16 %v294, %v292
    %v329 = vpack.c.b16 %v297, %v295
    %v330 = vpack.c.b16 %v298, %v296
    %363 = vmatprep.subr.bf16.mxu0 %v300
    %364 = vmatpush1.bf16.msra.mxu0 %v299
    %365 = vmatprep.subr.bf16.mxu0 %v302
    %366 = vmatpush1.bf16.msra.mxu0 %v301
    %367 = vmatprep.subr.bf16.mxu0 %v304
    %368 = vmatpush1.bf16.msra.mxu0 %v303
    %369 = vmatprep.subr.bf16.mxu0 %v306
    %370 = vmatpush1.bf16.msra.mxu0 %v305
    %371 = vmatprep.subr.bf16.mxu0 %v308
    %372 = vmatpush1.bf16.msra.mxu0 %v307
    %373 = vmatprep.subr.bf16.mxu0 %v310
    %374 = vmatpush1.bf16.msra.mxu0 %v309
    %375 = vmatprep.subr.bf16.mxu0 %v312
    %376 = vmatpush1.bf16.msra.mxu0 %v311
    %377 = vmatprep.subr.bf16.mxu0 %v314
    %378 = vmatpush1.bf16.msra.mxu0 %v313
    %379 = vmatprep.subr.bf16.mxu0 %v316
    %380 = vmatpush1.bf16.msra.mxu0 %v315
    %381 = vmatprep.subr.bf16.mxu0 %v318
    %382 = vmatpush1.bf16.msra.mxu0 %v317
    %383 = vmatprep.subr.bf16.mxu0 %v320
    %384 = vmatpush1.bf16.msra.mxu0 %v319
    %385 = vmatprep.subr.bf16.mxu0 %v322
    %386 = vmatpush1.bf16.msra.mxu0 %v321
    %387 = vmatprep.subr.bf16.mxu0 %v324
    %388 = vmatpush1.bf16.msra.mxu0 %v323
    %389 = vmatprep.subr.bf16.mxu0 %v326
    %390 = vmatpush1.bf16.msra.mxu0 %v325
    %391 = vmatprep.subr.bf16.mxu0 %v328
    %392 = vmatpush1.bf16.msra.mxu0 %v327
    %393 = vmatprep.subr.bf16.mxu0 %v330
    %394 = vmatpush1.bf16.msra.mxu0 %v329
    %395 = vmatprep.mubr.bf16.mxu0 %v158
    %396 = vmatmul.mubr.bf16.gmra.mrb[0].mxu0 %v157
    %v397 = vpop.f32.mrb[0].mxu0
    %v398 = vadd.f32 %v196, %v397
    %v399 = vpop.f32.mrb[0].mxu0
    %v400 = vadd.f32 %v200, %v399
    %v401 = vpop.f32.mrb[0].mxu0
    %v402 = vadd.f32 %v196, %v401
    %v403 = vpop.f32.mrb[0].mxu0
    %v404 = vadd.f32 %v200, %v403
    %405 = vdwg.mxu0
    %v406 = vmul.f32 %v398, 0.2
    %v407 = vmul.f32 %v400, 0.2
    %v408 = vmul.f32 %v402, 0.2
    %v409 = vmul.f32 %v404, 0.2
    %v410 = vmax.f32 %v398, %v406
    %v411 = vmax.f32 %v400, %v407
    %v412 = vmax.f32 %v402, %v408
    %v413 = vmax.f32 %v404, %v409
    %414 = vst [vmem:[#allocation8] sm:$0xff] %v410
    %415 = vst [vmem:[#allocation8 + $0x8] sm:$0xff] %v411
    %416 = vst [vmem:[#allocation8 + $0x10] sm:$0xff] %v412
    %417 = vst [vmem:[#allocation8 + $0x18] sm:$0xff] %v413
    // Predicated region
    $region34: #{tpu_custom_call.1} parent=1 // pred_check
      _
    $region35: #{tpu_custom_call.1} parent=1 // pred_check_branch
      %419 = sbr.rel (0) target = $region37
    $region36: #{tpu_custom_call.1} parent=1 // pred_region
      %s421 = ssub.s32 512, 512
      %422 = vsyncadd [#allocation4], %s421
      %s423 = sshll.u32 [#allocation8], 4
      %s424 = int_to_ptr.vmem [resolvable:$true] %s423
      %429 = dma.vmem_to_hbm [thread:$0]  %s424, 512, %s5, [#allocation4], 256, 256, 16
    $region37: #{tpu_custom_call.1} parent=1 // pred_fallthru
      _
    // Predicated region
    $region38: #{tpu_custom_call.1} parent=1 // pred_check
      _
    $region39: #{tpu_custom_call.1} parent=1 // pred_check_branch
      %431 = sbr.rel (0) target = $region41
    $region40: #{tpu_custom_call.1} parent=1 // pred_region
      %432 = dma.done [#allocation4], 512
    $region41: #{tpu_custom_call.1} parent=1 // pred_fallthru
      _
    %433 = vsyncpa [#allocation3], 1
    %434 = vsyncpa [#allocation6], 1
    %435 = vsyncpa [#allocation4], 1

// kernel: tpu_custom_call.1
$region0: #{tpu_custom_call.1}
  #allocation0 [shape = 'u32[]', space=smem, size = 0x4, offset = 0x4, fixed_abs, tag = 'smem constant byte address 0x4 - core index']
  #allocation1 [shape = 'u32[144,128]{1,0:T(1,128)}', space=vmem, size = 0x12000, scoped, tag = 'internal scratch']
  %s0 = inlined_call_operand.hbm [shape: f32[16,32], index: 0, kind: input, shape index: {}]
  %s1 = inlined_call_operand.hbm [shape: bf16[32,256], index: 1, kind: input, shape index: {}]
  %s2 = inlined_call_operand.vmem [shape: f32[1,256], index: 2, kind: input, shape index: {}]
  %s3 = inlined_call_operand.hbm [shape: bf16[256,256], index: 3, kind: input, shape index: {}]
  %s4 = inlined_call_operand.vmem [shape: f32[1,256], index: 4, kind: input, shape index: {}]
  %s5 = inlined_call_operand.hbm [shape: f32[16,256], index: 5, kind: output, shape index: {}]
  %s6 = sld [smem:[#allocation0]]
  $region42: #{tpu_custom_call.1} parent=0
    _
  %s8 = ssub.s32 1, %s6
  %s9 = scalar_select 0, %s8, %s6
  $region1: #{tpu_custom_call.1} parent=0
    #allocation2 [shape = 'u8[8192]{0}', space=vmem, size = 0x2000, scoped, tag = 'input window, operand 0, single buffered']
    #allocation3 [shape = 's32[1]{0}', space=sflag, size = 0x4, scoped, tag = 'scoped memory for tpu_custom_call.1']
    #allocation4 [shape = 's32[1]{0}', space=sflag, size = 0x4, scoped, tag = 'scoped memory for tpu_custom_call.1']
    #allocation5 [shape = 'u8[16384]{0}', space=vmem, size = 0x4000, scoped, tag = 'input window, operand 1, single buffered']
    #allocation6 [shape = 's32[1]{0}', space=sflag, size = 0x4, scoped, tag = 'scoped memory for tpu_custom_call.1']
    #allocation7 [shape = 'u8[131072]{0}', space=vmem, size = 0x20000, scoped, tag = 'input window, operand 3, single buffered']
    #allocation8 [shape = 'u8[16384]{0}', space=vmem, size = 0x4000, scoped, tag = 'output window, operand 0, single buffered']
    %10 = vsyncpa [#allocation3], 0
    %11 = vsyncpa [#allocation6], 0
    %12 = vsyncpa [#allocation4], 0
    // Predicated region
    $region2: #{tpu_custom_call.1} parent=1 // pred_check
      _
    $region3: #{tpu_custom_call.1} parent=1 // pred_check_branch
      %14 = sbr.rel (0) target = $region5
    $region4: #{tpu_custom_call.1} parent=1 // pred_region
      %s16 = ssub.s32 256, 256
      %17 = vsyncadd [#allocation3], %s16
      %s18 = sshll.u32 [#allocation2], 4
      %s19 = int_to_ptr.vmem [resolvable:$true] %s18
      %24 = dma.hbm_to_vmem [thread:$0]  %s0, 256, %s19, [#allocation3], 128, 128, 8
    $region5: #{tpu_custom_call.1} parent=1 // pred_fallthru
      _
    // Predicated region
    $region6: #{tpu_custom_call.1} parent=1 // pred_check
      _
    $region7: #{tpu_custom_call.1} parent=1 // pred_check_branch
      %26 = sbr.rel (0) target = $region9
    $region8: #{tpu_custom_call.1} parent=1 // pred_region
      %s28 = ssub.s32 512, 512
      %29 = vsyncadd [#allocation6], %s28
      %s30 = sshll.u32 [#allocation5], 4
      %s31 = int_to_ptr.vmem [resolvable:$true] %s30
      %36 = dma.hbm_to_vmem [thread:$0]  %s1, 512, %s31, [#allocation6], 128, 128, 8
    $region9: #{tpu_custom_call.1} parent=1 // pred_fallthru
      _
    // Predicated region
    $region10: #{tpu_custom_call.1} parent=1 // pred_check
      _
    $region11: #{tpu_custom_call.1} parent=1 // pred_check_branch
      %38 = sbr.rel (0) target = $region13
    $region12: #{tpu_custom_call.1} parent=1 // pred_region
      _
    $region13: #{tpu_custom_call.1} parent=1 // pred_fallthru
      _
    // Predicated region
    $region14: #{tpu_custom_call.1} parent=1 // pred_check
      _
    $region15: #{tpu_custom_call.1} parent=1 // pred_check_branch
      %40 = sbr.rel (0) target = $region17
    $region16: #{tpu_custom_call.1} parent=1 // pred_region
      %s42 = ssub.s32 4096, 4096
      %43 = vsyncadd [#allocation6], %s42
      %s44 = sshll.u32 [#allocation7], 4
      %s45 = int_to_ptr.vmem [resolvable:$true] %s44
      %50 = dma.hbm_to_vmem [thread:$0]  %s3, 4096, %s45, [#allocation6], 128, 128, 8
    $region17: #{tpu_custom_call.1} parent=1 // pred_fallthru
      _
    // Predicated region
    $region18: #{tpu_custom_call.1} parent=1 // pred_check
      _
    $region19: #{tpu_custom_call.1} parent=1 // pred_check_branch
      %52 = sbr.rel (0) target = $region21
    $region20: #{tpu_custom_call.1} parent=1 // pred_region
      _
    $region21: #{tpu_custom_call.1} parent=1 // pred_fallthru
      _
    // Predicated region
    $region22: #{tpu_custom_call.1} parent=1 // pred_check
      _
    $region23: #{tpu_custom_call.1} parent=1 // pred_check_branch
      %54 = sbr.rel (0) target = $region25
    $region24: #{tpu_custom_call.1} parent=1 // pred_region
      %55 = dma.done [#allocation3], 256
    $region25: #{tpu_custom_call.1} parent=1 // pred_fallthru
      _
    // Predicated region
    $region26: #{tpu_custom_call.1} parent=1 // pred_check
      _
    $region27: #{tpu_custom_call.1} parent=1 // pred_check_branch
      %57 = sbr.rel (0) target = $region29
    $region28: #{tpu_custom_call.1} parent=1 // pred_region
      %58 = dma.done [#allocation6], 512
    $region29: #{tpu_custom_call.1} parent=1 // pred_fallthru
      _
    // Predicated region
    $region30: #{tpu_custom_call.1} parent=1 // pred_check
      _
    $region31: #{tpu_custom_call.1} parent=1 // pred_check_branch
      %60 = sbr.rel (0) target = $region33
    $region32: #{tpu_custom_call.1} parent=1 // pred_region
      %61 = dma.done [#allocation6], 4096
    $region33: #{tpu_custom_call.1} parent=1 // pred_fallthru
      _
    %v63 = vld [vmem:[#allocation2] sm:$0xff]
    %v64 = vld [vmem:[#allocation2 + $0x8] sm:$0xff]
    %v65 = vpack.c.bf16 %v64, %v63
    %v66 = vld [vmem:[#allocation5] sm:$0xff]
    %v67 = vld [vmem:[#allocation5 + $0x8] sm:$0xff]
    %v68 = vld [vmem:[#allocation5 + $0x10] sm:$0xff]
    %v69 = vld [vmem:[#allocation5 + $0x18] sm:$0xff]
    %v70 = vld [vmem:[%s2] sm:$0x3]
    %v72 = vlaneseq
    %v73 = vshrl.u32 %v72, 7
    %v74 = vsub.s32 0, %v73
    %v75 = vrot.slane %v70, %v74
    %v76 = vlaneseq
    %v77 = vshrl.u32 %v76, 7
    %v78 = vsub.s32 1, %v77
    %v79 = vrot.slane %v70, %v78
    %v86 = vunpack.c.l.b16 %v66
    %v87 = vunpack.c.h.b16 %v66
    %v88 = vunpack.c.l.b16 %v67
    %v89 = vunpack.c.h.b16 %v67
    %v90 = vunpack.c.l.b16 %v68
    %v91 = vunpack.c.h.b16 %v68
    %v92 = vunpack.c.l.b16 %v69
    %v93 = vunpack.c.h.b16 %v69
    %v94 = vpack.c.b16 %v88, %v86
    %v95 = vpack.c.b16 %v89, %v87
    %v96 = vpack.c.b16 %v92, %v90
    %v97 = vpack.c.b16 %v93, %v91
    %vm102 = vcmask 261120
    %v104 = vsel %vm102, %v65, 0
    %106 = vmatprep.subr.bf16.mxu0 %v95
    %107 = vmatpush1.bf16.msra.mxu0 %v94
    %108 = vmatprep.subr.bf16.mxu0 %v97
    %109 = vmatpush1.bf16.msra.mxu0 %v96
    %110 = vmatprep.subr.bf16.mxu0 0
    %111 = vmatpush1.bf16.msra.mxu0 0
    %112 = vmatprep.subr.bf16.mxu0 0
    %113 = vmatpush1.bf16.msra.mxu0 0
    %114 = vmatprep.subr.bf16.mxu0 0
    %115 = vmatpush1.bf16.msra.mxu0 0
    %116 = vmatprep.subr.bf16.mxu0 0
    %117 = vmatpush1.bf16.msra.mxu0 0
    %118 = vmatprep.subr.bf16.mxu0 0
    %119 = vmatpush1.bf16.msra.mxu0 0
    %120 = vmatprep.subr.bf16.mxu0 0
    %121 = vmatpush1.bf16.msra.mxu0 0
    %122 = vmatprep.subr.bf16.mxu0 0
    %123 = vmatpush1.bf16.msra.mxu0 0
    %124 = vmatprep.subr.bf16.mxu0 0
    %125 = vmatpush1.bf16.msra.mxu0 0
    %126 = vmatprep.subr.bf16.mxu0 0
    %127 = vmatpush1.bf16.msra.mxu0 0
    %128 = vmatprep.subr.bf16.mxu0 0
    %129 = vmatpush1.bf16.msra.mxu0 0
    %130 = vmatprep.subr.bf16.mxu0 0
    %131 = vmatpush1.bf16.msra.mxu0 0
    %132 = vmatprep.subr.bf16.mxu0 0
    %133 = vmatpush1.bf16.msra.mxu0 0
    %134 = vmatprep.subr.bf16.mxu0 0
    %135 = vmatpush1.bf16.msra.mxu0 0
    %136 = vmatprep.subr.bf16.mxu0 0
    %137 = vmatpush1.bf16.msra.mxu0 0
    %138 = vmatprep.mubr.bf16.mxu0 0
    %139 = vmatmul.mubr.bf16.gmra.mrb[0].mxu0 %v104
    %v140 = vpop.f32.mrb[0].mxu0
    %v141 = vadd.f32 %v75, %v140
    %v142 = vpop.f32.mrb[0].mxu0
    %v143 = vadd.f32 %v79, %v142
    %v144 = vpop.f32.mrb[0].mxu0
    %v145 = vadd.f32 %v75, %v144
    %v146 = vpop.f32.mrb[0].mxu0
    %v147 = vadd.f32 %v79, %v146
    %148 = vdwg.mxu0
    %v149 = vmul.f32 %v141, 0.2
    %v150 = vmul.f32 %v143, 0.2
    %v151 = vmul.f32 %v145, 0.2
    %v152 = vmul.f32 %v147, 0.2
    %v153 = vmax.f32 %v141, %v149
    %v154 = vmax.f32 %v143, %v150
    %v155 = vmax.f32 %v145, %v151
    %v156 = vmax.f32 %v147, %v152
    %v157 = vpack.c.bf16 %v155, %v153
    %v158 = vpack.c.bf16 %v156, %v154
    %v159 = vld [vmem:[#allocation7] sm:$0xff]
    %v160 = vld [vmem:[#allocation7 + $0x8] sm:$0xff]
    %v161 = vld [vmem:[#allocation7 + $0x10] sm:$0xff]
    %v162 = vld [vmem:[#allocation7 + $0x18] sm:$0xff]
    %v163 = vld [vmem:[#allocation7 + $0x20] sm:$0xff]
    %v164 = vld [vmem:[#allocation7 + $0x28] sm:$0xff]
    %v165 = vld [vmem:[#allocation7 + $0x30] sm:$0xff]
    %v166 = vld [vmem:[#allocation7 + $0x38] sm:$0xff]
    %v167 = vld [vmem:[#allocation7 + $0x40] sm:$0xff]
    %v168 = vld [vmem:[#allocation7 + $0x48] sm:$0xff]
    %v169 = vld [vmem:[#allocation7 + $0x50] sm:$0xff]
    %v170 = vld [vmem:[#allocation7 + $0x58] sm:$0xff]
    %v171 = vld [vmem:[#allocation7 + $0x60] sm:$0xff]
    %v172 = vld [vmem:[#allocation7 + $0x68] sm:$0xff]
    %v173 = vld [vmem:[#allocation7 + $0x70] sm:$0xff]
    %v174 = vld [vmem:[#allocation7 + $0x78] sm:$0xff]
    %v175 = vld [vmem:[#allocation7 + $0x80] sm:$0xff]
    %v176 = vld [vmem:[#allocation7 + $0x88] sm:$0xff]
    %v177 = vld [vmem:[#allocation7 + $0x90] sm:$0xff]
    %v178 = vld [vmem:[#allocation7 + $0x98] sm:$0xff]
    %v179 = vld [vmem:[#allocation7 + $0xa0] sm:$0xff]
    %v180 = vld [vmem:[#allocation7 + $0xa8] sm:$0xff]
    %v181 = vld [vmem:[#allocation7 + $0xb0] sm:$0xff]
    %v182 = vld [vmem:[#allocation7 + $0xb8] sm:$0xff]
    %v183 = vld [vmem:[#allocation7 + $0xc0] sm:$0xff]
    %v184 = vld [vmem:[#allocation7 + $0xc8] sm:$0xff]
    %v185 = vld [vmem:[#allocation7 + $0xd0] sm:$0xff]
    %v186 = vld [vmem:[#allocation7 + $0xd8] sm:$0xff]
    %v187 = vld [vmem:[#allocation7 + $0xe0] sm:$0xff]
    %v188 = vld [vmem:[#allocation7 + $0xe8] sm:$0xff]
    %v189 = vld [vmem:[#allocation7 + $0xf0] sm:$0xff]
    %v190 = vld [vmem:[#allocation7 + $0xf8] sm:$0xff]
    %v191 = vld [vmem:[%s4] sm:$0x3]
    %v193 = vlaneseq
    %v194 = vshrl.u32 %v193, 7
    %v195 = vsub.s32 0, %v194
    %v196 = vrot.slane %v191, %v195
    %v197 = vlaneseq
    %v198 = vshrl.u32 %v197, 7
    %v199 = vsub.s32 1, %v198
    %v200 = vrot.slane %v191, %v199
    %v235 = vunpack.c.l.b16 %v159
    %v236 = vunpack.c.h.b16 %v159
    %v237 = vunpack.c.l.b16 %v160
    %v238 = vunpack.c.h.b16 %v160
    %v239 = vunpack.c.l.b16 %v161
    %v240 = vunpack.c.h.b16 %v161
    %v241 = vunpack.c.l.b16 %v162
    %v242 = vunpack.c.h.b16 %v162
    %v243 = vunpack.c.l.b16 %v163
    %v244 = vunpack.c.h.b16 %v163
    %v245 = vunpack.c.l.b16 %v164
    %v246 = vunpack.c.h.b16 %v164
    %v247 = vunpack.c.l.b16 %v165
    %v248 = vunpack.c.h.b16 %v165
    %v249 = vunpack.c.l.b16 %v166
    %v250 = vunpack.c.h.b16 %v166
    %v251 = vunpack.c.l.b16 %v167
    %v252 = vunpack.c.h.b16 %v167
    %v253 = vunpack.c.l.b16 %v168
    %v254 = vunpack.c.h.b16 %v168
    %v255 = vunpack.c.l.b16 %v169
    %v256 = vunpack.c.h.b16 %v169
    %v257 = vunpack.c.l.b16 %v170
    %v258 = vunpack.c.h.b16 %v170
    %v259 = vunpack.c.l.b16 %v171
    %v260 = vunpack.c.h.b16 %v171
    %v261 = vunpack.c.l.b16 %v172
    %v262 = vunpack.c.h.b16 %v172
    %v263 = vunpack.c.l.b16 %v173
    %v264 = vunpack.c.h.b16 %v173
    %v265 = vunpack.c.l.b16 %v174
    %v266 = vunpack.c.h.b16 %v174
    %v267 = vunpack.c.l.b16 %v175
    %v268 = vunpack.c.h.b16 %v175
    %v269 = vunpack.c.l.b16 %v176
    %v270 = vunpack.c.h.b16 %v176
    %v271 = vunpack.c.l.b16 %v177
    %v272 = vunpack.c.h.b16 %v177
    %v273 = vunpack.c.l.b16 %v178
    %v274 = vunpack.c.h.b16 %v178
    %v275 = vunpack.c.l.b16 %v179
    %v276 = vunpack.c.h.b16 %v179
    %v277 = vunpack.c.l.b16 %v180
    %v278 = vunpack.c.h.b16 %v180
    %v279 = vunpack.c.l.b16 %v181
    %v280 = vunpack.c.h.b16 %v181
    %v281 = vunpack.c.l.b16 %v182
    %v282 = vunpack.c.h.b16 %v182
    %v283 = vunpack.c.l.b16 %v183
    %v284 = vunpack.c.h.b16 %v183
    %v285 = vunpack.c.l.b16 %v184
    %v286 = vunpack.c.h.b16 %v184
    %v287 = vunpack.c.l.b16 %v185
    %v288 = vunpack.c.h.b16 %v185
    %v289 = vunpack.c.l.b16 %v186
    %v290 = vunpack.c.h.b16 %v186
    %v291 = vunpack.c.l.b16 %v187
    %v292 = vunpack.c.h.b16 %v187
    %v293 = vunpack.c.l.b16 %v188
    %v294 = vunpack.c.h.b16 %v188
    %v295 = vunpack.c.l.b16 %v189
    %v296 = vunpack.c.h.b16 %v189
    %v297 = vunpack.c.l.b16 %v190
    %v298 = vunpack.c.h.b16 %v190
    %v299 = vpack.c.b16 %v237, %v235
    %v300 = vpack.c.b16 %v238, %v236
    %v301 = vpack.c.b16 %v241, %v239
    %v302 = vpack.c.b16 %v242, %v240
    %v303 = vpack.c.b16 %v245, %v243
    %v304 = vpack.c.b16 %v246, %v244
    %v305 = vpack.c.b16 %v249, %v247
    %v306 = vpack.c.b16 %v250, %v248
    %v307 = vpack.c.b16 %v253, %v251
    %v308 = vpack.c.b16 %v254, %v252
    %v309 = vpack.c.b16 %v257, %v255
    %v310 = vpack.c.b16 %v258, %v256
    %v311 = vpack.c.b16 %v261, %v259
    %v312 = vpack.c.b16 %v262, %v260
    %v313 = vpack.c.b16 %v265, %v263
    %v314 = vpack.c.b16 %v266, %v264
    %v315 = vpack.c.b16 %v269, %v267
    %v316 = vpack.c.b16 %v270, %v268
    %v317 = vpack.c.b16 %v273, %v271
    %v318 = vpack.c.b16 %v274, %v272
    %v319 = vpack.c.b16 %v277, %v275
    %v320 = vpack.c.b16 %v278, %v276
    %v321 = vpack.c.b16 %v281, %v279
    %v322 = vpack.c.b16 %v282, %v280
    %v323 = vpack.c.b16 %v285, %v283
    %v324 = vpack.c.b16 %v286, %v284
    %v325 = vpack.c.b16 %v289, %v287
    %v326 = vpack.c.b16 %v290, %v288
    %v327 = vpack.c.b16 %v293, %v291
    %v328 = vpack.c.b16 %v294, %v292
    %v329 = vpack.c.b16 %v297, %v295
    %v330 = vpack.c.b16 %v298, %v296
    %363 = vmatprep.subr.bf16.mxu0 %v300
    %364 = vmatpush1.bf16.msra.mxu0 %v299
    %365 = vmatprep.subr.bf16.mxu0 %v302
    %366 = vmatpush1.bf16.msra.mxu0 %v301
    %367 = vmatprep.subr.bf16.mxu0 %v304
    %368 = vmatpush1.bf16.msra.mxu0 %v303
    %369 = vmatprep.subr.bf16.mxu0 %v306
    %370 = vmatpush1.bf16.msra.mxu0 %v305
    %371 = vmatprep.subr.bf16.mxu0 %v308
    %372 = vmatpush1.bf16.msra.mxu0 %v307
    %373 = vmatprep.subr.bf16.mxu0 %v310
    %374 = vmatpush1.bf16.msra.mxu0 %v309
    %375 = vmatprep.subr.bf16.mxu0 %v312
    %376 = vmatpush1.bf16.msra.mxu0 %v311
    %377 = vmatprep.subr.bf16.mxu0 %v314
    %378 = vmatpush1.bf16.msra.mxu0 %v313
    %379 = vmatprep.subr.bf16.mxu0 %v316
    %380 = vmatpush1.bf16.msra.mxu0 %v315
    %381 = vmatprep.subr.bf16.mxu0 %v318
    %382 = vmatpush1.bf16.msra.mxu0 %v317
    %383 = vmatprep.subr.bf16.mxu0 %v320
    %384 = vmatpush1.bf16.msra.mxu0 %v319
    %385 = vmatprep.subr.bf16.mxu0 %v322
    %386 = vmatpush1.bf16.msra.mxu0 %v321
    %387 = vmatprep.subr.bf16.mxu0 %v324
    %388 = vmatpush1.bf16.msra.mxu0 %v323
    %389 = vmatprep.subr.bf16.mxu0 %v326
    %390 = vmatpush1.bf16.msra.mxu0 %v325
    %391 = vmatprep.subr.bf16.mxu0 %v328
    %392 = vmatpush1.bf16.msra.mxu0 %v327
    %393 = vmatprep.subr.bf16.mxu0 %v330
    %394 = vmatpush1.bf16.msra.mxu0 %v329
    %395 = vmatprep.mubr.bf16.mxu0 %v158
    %396 = vmatmul.mubr.bf16.gmra.mrb[0].mxu0 %v157
    %v397 = vpop.f32.mrb[0].mxu0
    %v398 = vadd.f32 %v196, %v397
    %v399 = vpop.f32.mrb[0].mxu0
    %v400 = vadd.f32 %v200, %v399
    %v401 = vpop.f32.mrb[0].mxu0
    %v402 = vadd.f32 %v196, %v401
    %v403 = vpop.f32.mrb[0].mxu0
    %v404 = vadd.f32 %v200, %v403
    %405 = vdwg.mxu0
    %v406 = vmul.f32 %v398, 0.2
    %v407 = vmul.f32 %v400, 0.2
    %v408 = vmul.f32 %v402, 0.2
    %v409 = vmul.f32 %v404, 0.2
    %v410 = vmax.f32 %v398, %v406
    %v411 = vmax.f32 %v400, %v407
    %v412 = vmax.f32 %v402, %v408
    %v413 = vmax.f32 %v404, %v409
    %414 = vst [vmem:[#allocation8] sm:$0xff] %v410
    %415 = vst [vmem:[#allocation8 + $0x8] sm:$0xff] %v411
    %416 = vst [vmem:[#allocation8 + $0x10] sm:$0xff] %v412
    %417 = vst [vmem:[#allocation8 + $0x18] sm:$0xff] %v413
    // Predicated region
    $region34: #{tpu_custom_call.1} parent=1 // pred_check
      _
    $region35: #{tpu_custom_call.1} parent=1 // pred_check_branch
      %419 = sbr.rel (0) target = $region37
    $region36: #{tpu_custom_call.1} parent=1 // pred_region
      %s421 = ssub.s32 512, 512
      %422 = vsyncadd [#allocation4], %s421
      %s423 = sshll.u32 [#allocation8], 4
      %s424 = int_to_ptr.vmem [resolvable:$true] %s423
      %429 = dma.vmem_to_hbm [thread:$0]  %s424, 512, %s5, [#allocation4], 256, 256, 16
    $region37: #{tpu_custom_call.1} parent=1 // pred_fallthru
      _
    // Predicated region
    $region38: #{tpu_custom_call.1} parent=1 // pred_check
      _
    $region39: #{tpu_custom_call.1} parent=1 // pred_check_branch
      %431 = sbr.rel (0) target = $region41
    $region40: #{tpu_custom_call.1} parent=1 // pred_region
      %432 = dma.done [#allocation4], 512
    $region41: #{tpu_custom_call.1} parent=1 // pred_fallthru
      _
    %433 = vsyncpa [#allocation3], 1
    %434 = vsyncpa [#allocation6], 1
    %435 = vsyncpa [#allocation4], 1

</llo_original>
